<compile_context>
chip_gen: v7x
topology: tpu7x:2x2x1
jax: 0.10.0
libtpu: 0.0.40
codegen_flags: <defaults>
</compile_context>

<pallas_src>
import jax
import jax.numpy as jnp
from jax.experimental import pallas as pl
from jax.experimental.pallas import tpu as pltpu


_LANE = 128  # lane width == MXU dimension


def _round_up(x, m):
    return (x + m - 1) // m * m


def _default_vmem_budget():
    """~75% of physical VMEM, capped at 96 MiB (v5e/v6e: 96 MiB, v7x: 48 MiB)."""
    phys = 64 * 1024 * 1024  # conservative fallback = v7x per-TC VMEM
    try:
        phys = int(pltpu.get_tpu_info().vmem_capacity_bytes)
    except Exception:
        pass
    return min((phys * 3) // 4, 96 * 1024 * 1024)


def _videofc_kernel(x_ref, w_ref, b_ref, o_ref):
    # x_ref: (tm, in_dim) in the input dtype (e.g. f32)
    # w_ref: (in_dim, H)  folded weight in the compute dtype (bf16 or f32)
    # b_ref: (1, H)       folded bias, kept in f32
    # o_ref: (tm, H)
    x = x_ref[...].astype(w_ref.dtype)  # in-kernel cast: VPU filler under MXU slack
    acc = jnp.dot(x, w_ref[...], preferred_element_type=jnp.float32)
    # Dropout: identity in eval mode.
    o_ref[...] = (acc + b_ref[...]).astype(o_ref.dtype)


def videofc_forward(x, w1, b1, w2, b2, *, tile_m=512,
                    compute_dtype=jnp.bfloat16, out_dtype=None,
                    vmem_budget_bytes=None, single_buffer_weights=True):
    """x: [B, T, in_dim] -> [B, T, hidden].

    w1: [in_dim, glimpse*hidden]  (stacked per-glimpse weights), b1: [glimpse*hidden]
    w2: [glimpse*hidden, hidden]  (vemb_proj weight, transposed), b2: [hidden]
    """
    B, T, in_dim = x.shape
    gh = w1.shape[1]
    hidden = w2.shape[1]
    assert w1.shape[0] == in_dim and w2.shape[0] == gh
    assert b1.shape == (gh,) and b2.shape == (hidden,)
    M = B * T

    x_dt = jnp.dtype(x.dtype)
    o_dt = jnp.dtype(out_dtype) if out_dtype is not None else x_dt
    cdt = jnp.dtype(compute_dtype) if compute_dtype is not None else x_dt
    x_item, c_item, o_item = x_dt.itemsize, cdt.itemsize, o_dt.itemsize

    # ---- Fold the two Linears (exact in f32: Linear -> cat -> Linear, no activation).
    w2f = w2.astype(jnp.float32)
    w_folded = jnp.dot(w1.astype(jnp.float32), w2f)                      # [in_dim, hidden]
    b_folded = jnp.dot(b1.astype(jnp.float32), w2f) + b2.astype(jnp.float32)  # [hidden]

    # Lane-dense output dim (pad hidden up to a multiple of 128 for unmasked stores).
    # in_dim / x are left un-padded: avoids an extra HBM pad pass over x.
    H = _round_up(hidden, _LANE)
    wp = jnp.pad(w_folded, ((0, 0), (0, H - hidden))).astype(cdt)
    bp = jnp.pad(b_folded, ((0, H - hidden),)).reshape(1, H)             # stays f32

    if vmem_budget_bytes is None:
        vmem_budget_bytes = _default_vmem_budget()

    # ---- M tile: multiple of 128, default 512, shrunk to fit the VMEM budget.
    tm = min(_round_up(max(tile_m, _LANE), _LANE), _round_up(M, _LANE))
    n_wbuf = 1 if single_buffer_weights else 2

    def _vmem_bytes(tm_):
        io = 2 * tm_ * in_dim * x_item + 2 * tm_ * H * o_item    # double-buffered x / out
        wt = n_wbuf * (in_dim * H * c_item + H * 4)              # resident weight + bias
        tmp = tm_ * (in_dim * c_item + H * 4)                    # in-kernel x cast + f32 acc
        return io + wt + tmp

    while tm > _LANE and _vmem_bytes(tm) > vmem_budget_bytes:
        tm -= _LANE

    grid = (pl.cdiv(M, tm),)                 # ragged last block: output writes are masked
    x2 = x.reshape(M, in_dim)                # free: contiguous leading-dim collapse

    cost = pl.CostEstimate(
        flops=2 * M * in_dim * H,
        transcendentals=0,
        bytes_accessed=(M * in_dim * x_item + in_dim * H * c_item
                        + H * 4 + M * H * o_item),
    )
    cparams = pltpu.CompilerParams(
        dimension_semantics=("parallel",),
        vmem_limit_bytes=int(vmem_budget_bytes) + 4 * 1024 * 1024,
    )

    def _call(use_single_buffer):
        if use_single_buffer:
            def const_spec(shape):
                return pl.BlockSpec(shape, lambda i: (0, 0),
                                    pipeline_mode=pl.Buffered(1))
        else:
            def const_spec(shape):
                return pl.BlockSpec(shape, lambda i: (0, 0))
        return pl.pallas_call(
            _videofc_kernel,
            out_shape=jax.ShapeDtypeStruct((M, H), o_dt),
            grid_spec=pltpu.PrefetchScalarGridSpec(
                num_scalar_prefetch=0,
                grid=grid,
                in_specs=[
                    pl.BlockSpec((tm, in_dim), lambda i: (i, 0)),
                    const_spec((in_dim, H)),
                    const_spec((1, H)),
                ],
                out_specs=pl.BlockSpec((tm, H), lambda i: (i, 0)),
            ),
            compiler_params=cparams,
            cost_estimate=cost,
        )(x2, wp, bp)

    if single_buffer_weights:
        try:
            out = _call(True)
        except Exception:
            # Fallback if pipeline_mode=pl.Buffered(1) is not supported by this build;
            # weights are tiny after folding, so double-buffering them is harmless.
            out = _call(False)
    else:
        out = _call(False)

    return out[:, :hidden].reshape(B, T, hidden)


def init_params(key, glimpse, in_dim, hidden, dtype=jnp.float32):
    """Deterministic parameter init matching nn.Linear shapes.

    PyTorch: v_proj[g].weight: (hidden, in_dim), bias: (hidden,)
             vemb_proj.weight: (hidden, glimpse*hidden), bias: (hidden,)
    Stored pre-transposed / pre-stacked for the kernel.
    """
    k1, k2, k3, k4 = jax.random.split(key, 4)
    vw = jax.random.normal(k1, (glimpse, hidden, in_dim), dtype) * 0.05
    w1 = jnp.transpose(vw, (2, 0, 1)).reshape(in_dim, glimpse * hidden)
    vb = jax.random.normal(k2, (glimpse, hidden), dtype) * 0.05
    b1 = vb.reshape(glimpse * hidden)
    ww = jax.random.normal(k3, (hidden, glimpse * hidden), dtype) * 0.05
    w2 = jnp.transpose(ww, (1, 0))
    b2 = jax.random.normal(k4, (hidden,), dtype) * 0.05
    return w1, b1, w2, b2


def reference_forward(x, w1, b1, w2, b2):
    """Pure-JAX reference: per-glimpse Linears -> concat -> vemb_proj (eval dropout)."""
    h = jnp.einsum("btk,kg->btg", x, w1) + b1
    return jnp.einsum("btg,gh->bth", h, w2) + b2


if __name__ == "__main__":
    glimpse, in_dim, hidden = 2, 32, 32
    B, T = 2, 8

    key = jax.random.PRNGKey(0)
    kx, kp = jax.random.split(key)
    x = jax.random.normal(kx, (B, T, in_dim), jnp.float32)
    w1, b1, w2, b2 = init_params(kp, glimpse, in_dim, hidden)

    ref = reference_forward(x, w1, b1, w2, b2)

    # Exact (f32 compute) path.
    out_f32 = jax.block_until_ready(
        videofc_forward(x, w1, b1, w2, b2, compute_dtype=jnp.float32))
    assert out_f32.shape == (B, T, hidden)
    assert jnp.allclose(out_f32, ref, atol=1e-4, rtol=1e-4)

    # Default bf16-MXU path (f32 accumulation, f32 bias) — looser tolerance.
    out_bf16 = jax.block_until_ready(videofc_forward(x, w1, b1, w2, b2))
    assert out_bf16.shape == (B, T, hidden)
    assert jnp.allclose(out_bf16, ref, atol=5e-2, rtol=5e-2)

    print("KERNEL_OK")
</pallas_src>

<mosaic_0001>
module attributes {stable_mosaic.version = 11 : i64} {
  func.func @_videofc_kernel(%arg0: i32, %arg1: memref<128x32xf32, #tpu.memory_space<vmem>>, %arg2: memref<32x128xf32, #tpu.memory_space<vmem>>, %arg3: memref<1x128xf32, #tpu.memory_space<vmem>>, %arg4: memref<128x128xf32, #tpu.memory_space<vmem>>) attributes {dimension_semantics = [#tpu.dimension_semantics<parallel>], iteration_bounds = array<i64: 1>, scalar_prefetch = 0 : i64, scratch_operands = 0 : i64, tpu.core_type = #tpu.core_type<tc>, window_params = [{transform_indices = @transform_0, window_bounds = array<i64: 128, 32>}, {pipeline_mode = #tpu.pipeline_mode<synchronous>, transform_indices = @transform_1, window_bounds = array<i64: 32, 128>}, {pipeline_mode = #tpu.pipeline_mode<synchronous>, transform_indices = @transform_2, window_bounds = array<i64: 1, 128>}, {transform_indices = @transform_3, window_bounds = array<i64: 128, 128>}]} {
    %c0 = arith.constant 0 : index
    %c0_0 = arith.constant 0 : index
    %0 = vector.load %arg1[%c0, %c0_0] : memref<128x32xf32, #tpu.memory_space<vmem>>, vector<128x32xf32>
    %c0_1 = arith.constant 0 : index
    %c0_2 = arith.constant 0 : index
    %1 = vector.load %arg2[%c0_1, %c0_2] : memref<32x128xf32, #tpu.memory_space<vmem>>, vector<32x128xf32>
    %cst = arith.constant dense<0.000000e+00> : vector<128x128xf32>
    %2 = tpu.matmul %0, %1, %cst {dimension_numbers = #tpu.dot_dimension_numbers<[1], [0], [0], [1], [0, 0, 1, 1], [], []>} : vector<128x32xf32>, vector<32x128xf32>, vector<128x128xf32> -> vector<128x128xf32>
    %c0_3 = arith.constant 0 : index
    %c0_4 = arith.constant 0 : index
    %3 = vector.load %arg3[%c0_3, %c0_4] : memref<1x128xf32, #tpu.memory_space<vmem>>, vector<1x128xf32>
    %4 = vector.broadcast %3 : vector<1x128xf32> to vector<128x128xf32>
    %5 = arith.addf %2, %4 : vector<128x128xf32>
    %c0_5 = arith.constant 0 : index
    %c0_6 = arith.constant 0 : index
    %6 = vector.load %arg4[%c0_5, %c0_6] : memref<128x128xf32, #tpu.memory_space<vmem>>, vector<128x128xf32>
    tpu.vector_store %arg4[%c0_5, %c0_6], %5 {strides = array<i32>} : memref<128x128xf32, #tpu.memory_space<vmem>>, vector<128x128xf32>,
    return
  }
  func.func @transform_0(%arg0: i32) -> (i32, i32) {
    %c0_i32 = arith.constant 0 : i32
    %c0_i32_0 = arith.constant 0 : i32
    return %arg0, %c0_i32 : i32, i32
  }
  func.func @transform_1(%arg0: i32) -> (i32, i32) {
    %c0_i32 = arith.constant 0 : i32
    %c0_i32_0 = arith.constant 0 : i32
    %c0_i32_1 = arith.constant 0 : i32
    return %c0_i32, %c0_i32_0 : i32, i32
  }
  func.func @transform_2(%arg0: i32) -> (i32, i32) {
    %c0_i32 = arith.constant 0 : i32
    %c0_i32_0 = arith.constant 0 : i32
    %c0_i32_1 = arith.constant 0 : i32
    return %c0_i32, %c0_i32_0 : i32, i32
  }
  func.func @transform_3(%arg0: i32) -> (i32, i32) {
    %c0_i32 = arith.constant 0 : i32
    %c0_i32_0 = arith.constant 0 : i32
    return %arg0, %c0_i32 : i32, i32
  }
}

module attributes {stable_mosaic.version = 11 : i64} {
  func.func @_videofc_kernel(%arg0: i32, %arg1: memref<128x32xf32, #tpu.memory_space<vmem>>, %arg2: memref<32x128xf32, #tpu.memory_space<vmem>>, %arg3: memref<1x128xf32, #tpu.memory_space<vmem>>, %arg4: memref<128x128xf32, #tpu.memory_space<vmem>>) attributes {dimension_semantics = [#tpu.dimension_semantics<parallel>], iteration_bounds = array<i64: 1>, scalar_prefetch = 0 : i64, scratch_operands = 0 : i64, tpu.core_type = #tpu.core_type<tc>, window_params = [{transform_indices = @transform_0, window_bounds = array<i64: 128, 32>}, {pipeline_mode = #tpu.pipeline_mode<synchronous>, transform_indices = @transform_1, window_bounds = array<i64: 32, 128>}, {pipeline_mode = #tpu.pipeline_mode<synchronous>, transform_indices = @transform_2, window_bounds = array<i64: 1, 128>}, {transform_indices = @transform_3, window_bounds = array<i64: 128, 128>}]} {
    %c0 = arith.constant 0 : index
    %c0_0 = arith.constant 0 : index
    %0 = vector.load %arg1[%c0, %c0_0] : memref<128x32xf32, #tpu.memory_space<vmem>>, vector<128x32xf32>
    %c0_1 = arith.constant 0 : index
    %c0_2 = arith.constant 0 : index
    %1 = vector.load %arg2[%c0_1, %c0_2] : memref<32x128xf32, #tpu.memory_space<vmem>>, vector<32x128xf32>
    %cst = arith.constant dense<0.000000e+00> : vector<128x128xf32>
    %2 = tpu.matmul %0, %1, %cst {dimension_numbers = #tpu.dot_dimension_numbers<[1], [0], [0], [1], [0, 0, 1, 1], [], []>} : vector<128x32xf32>, vector<32x128xf32>, vector<128x128xf32> -> vector<128x128xf32>
    %c0_3 = arith.constant 0 : index
    %c0_4 = arith.constant 0 : index
    %3 = vector.load %arg3[%c0_3, %c0_4] : memref<1x128xf32, #tpu.memory_space<vmem>>, vector<1x128xf32>
    %4 = vector.broadcast %3 : vector<1x128xf32> to vector<128x128xf32>
    %5 = arith.addf %2, %4 : vector<128x128xf32>
    %c0_5 = arith.constant 0 : index
    %c0_6 = arith.constant 0 : index
    %6 = vector.load %arg4[%c0_5, %c0_6] : memref<128x128xf32, #tpu.memory_space<vmem>>, vector<128x128xf32>
    tpu.vector_store %arg4[%c0_5, %c0_6], %5 {strides = array<i32>} : memref<128x128xf32, #tpu.memory_space<vmem>>, vector<128x128xf32>,
    return
  }
  func.func @transform_0(%arg0: i32) -> (i32, i32) {
    %c0_i32 = arith.constant 0 : i32
    %c0_i32_0 = arith.constant 0 : i32
    return %arg0, %c0_i32 : i32, i32
  }
  func.func @transform_1(%arg0: i32) -> (i32, i32) {
    %c0_i32 = arith.constant 0 : i32
    %c0_i32_0 = arith.constant 0 : i32
    %c0_i32_1 = arith.constant 0 : i32
    return %c0_i32, %c0_i32_0 : i32, i32
  }
  func.func @transform_2(%arg0: i32) -> (i32, i32) {
    %c0_i32 = arith.constant 0 : i32
    %c0_i32_0 = arith.constant 0 : i32
    %c0_i32_1 = arith.constant 0 : i32
    return %c0_i32, %c0_i32_0 : i32, i32
  }
  func.func @transform_3(%arg0: i32) -> (i32, i32) {
    %c0_i32 = arith.constant 0 : i32
    %c0_i32_0 = arith.constant 0 : i32
    return %arg0, %c0_i32 : i32, i32
  }
}

</mosaic_0001>

<llo_original>
// kernel: tpu_custom_call.1
$region0: #{tpu_custom_call.1}
  #allocation0 [shape = 'u32[]', space=smem, size = 0x4, offset = 0x4, fixed_abs, tag = 'smem constant byte address 0x4 - core index']
  #allocation1 [shape = 'u32[144,128]{1,0:T(1,128)}', space=vmem, size = 0x12000, scoped, tag = 'internal scratch']
  %s0 = inlined_call_operand.hbm [shape: f32[16,32], index: 0, kind: input, shape index: {}]
  %s1 = inlined_call_operand.hbm [shape: f32[32,128], index: 1, kind: input, shape index: {}]
  %s2 = inlined_call_operand.vmem [shape: f32[1,128], index: 2, kind: input, shape index: {}]
  %s3 = inlined_call_operand.hbm [shape: f32[16,128], index: 3, kind: output, shape index: {}]
  %s4 = sld [smem:[#allocation0]]
  $region30: #{tpu_custom_call.1} parent=0
    _
  %s6 = ssub.s32 1, %s4
  %s7 = scalar_select 0, %s6, %s4
  $region1: #{tpu_custom_call.1} parent=0
    #allocation2 [shape = 'u8[65536]{0}', space=vmem, size = 0x10000, scoped, tag = 'input window, operand 0, single buffered']
    #allocation3 [shape = 's32[1]{0}', space=sflag, size = 0x4, scoped, tag = 'scoped memory for tpu_custom_call.1']
    #allocation4 [shape = 's32[1]{0}', space=sflag, size = 0x4, scoped, tag = 'scoped memory for tpu_custom_call.1']
    #allocation5 [shape = 'u8[16384]{0}', space=vmem, size = 0x4000, scoped, tag = 'input window, operand 1, single buffered']
    #allocation6 [shape = 's32[1]{0}', space=sflag, size = 0x4, scoped, tag = 'scoped memory for tpu_custom_call.1']
    #allocation7 [shape = 'u8[65536]{0}', space=vmem, size = 0x10000, scoped, tag = 'output window, operand 0, single buffered']
    %8 = vsyncpa [#allocation3], 0
    %9 = vsyncpa [#allocation6], 0
    %10 = vsyncpa [#allocation4], 0
    // Predicated region
    $region2: #{tpu_custom_call.1} parent=1 // pred_check
      _
    $region3: #{tpu_custom_call.1} parent=1 // pred_check_branch
      %12 = sbr.rel (0) target = $region5
    $region4: #{tpu_custom_call.1} parent=1 // pred_region
      %s14 = ssub.s32 2048, 256
      %15 = vsyncadd [#allocation3], %s14
      %s16 = sshll.u32 [#allocation2], 4
      %s17 = int_to_ptr.vmem [resolvable:$true] %s16
      %22 = dma.hbm_to_vmem [thread:$0]  %s0, 256, %s17, [#allocation3], 128, 128, 8
    $region5: #{tpu_custom_call.1} parent=1 // pred_fallthru
      _
    // Predicated region
    $region6: #{tpu_custom_call.1} parent=1 // pred_check
      _
    $region7: #{tpu_custom_call.1} parent=1 // pred_check_branch
      %24 = sbr.rel (0) target = $region9
    $region8: #{tpu_custom_call.1} parent=1 // pred_region
      %s26 = ssub.s32 512, 512
      %27 = vsyncadd [#allocation6], %s26
      %s28 = sshll.u32 [#allocation5], 4
      %s29 = int_to_ptr.vmem [resolvable:$true] %s28
      %34 = dma.hbm_to_vmem [thread:$0]  %s1, 512, %s29, [#allocation6], 128, 128, 8
    $region9: #{tpu_custom_call.1} parent=1 // pred_fallthru
      _
    // Predicated region
    $region10: #{tpu_custom_call.1} parent=1 // pred_check
      _
    $region11: #{tpu_custom_call.1} parent=1 // pred_check_branch
      %36 = sbr.rel (0) target = $region13
    $region12: #{tpu_custom_call.1} parent=1 // pred_region
      _
    $region13: #{tpu_custom_call.1} parent=1 // pred_fallthru
      _
    // Predicated region
    $region14: #{tpu_custom_call.1} parent=1 // pred_check
      _
    $region15: #{tpu_custom_call.1} parent=1 // pred_check_branch
      %38 = sbr.rel (0) target = $region17
    $region16: #{tpu_custom_call.1} parent=1 // pred_region
      %39 = dma.done [#allocation3], 2048
    $region17: #{tpu_custom_call.1} parent=1 // pred_fallthru
      _
    // Predicated region
    $region18: #{tpu_custom_call.1} parent=1 // pred_check
      _
    $region19: #{tpu_custom_call.1} parent=1 // pred_check_branch
      %41 = sbr.rel (0) target = $region21
    $region20: #{tpu_custom_call.1} parent=1 // pred_region
      %42 = dma.done [#allocation6], 512
    $region21: #{tpu_custom_call.1} parent=1 // pred_fallthru
      _
    %v43 = vld [vmem:[#allocation2] sm:$0xff]
    %v44 = vld [vmem:[#allocation2 + $0x8] sm:$0xff]
    %v45 = vld [vmem:[#allocation2 + $0x10] sm:$0xff]
    %v46 = vld [vmem:[#allocation2 + $0x18] sm:$0xff]
    %v47 = vld [vmem:[#allocation2 + $0x20] sm:$0xff]
    %v48 = vld [vmem:[#allocation2 + $0x28] sm:$0xff]
    %v49 = vld [vmem:[#allocation2 + $0x30] sm:$0xff]
    %v50 = vld [vmem:[#allocation2 + $0x38] sm:$0xff]
    %v51 = vld [vmem:[#allocation2 + $0x40] sm:$0xff]
    %v52 = vld [vmem:[#allocation2 + $0x48] sm:$0xff]
    %v53 = vld [vmem:[#allocation2 + $0x50] sm:$0xff]
    %v54 = vld [vmem:[#allocation2 + $0x58] sm:$0xff]
    %v55 = vld [vmem:[#allocation2 + $0x60] sm:$0xff]
    %v56 = vld [vmem:[#allocation2 + $0x68] sm:$0xff]
    %v57 = vld [vmem:[#allocation2 + $0x70] sm:$0xff]
    %v58 = vld [vmem:[#allocation2 + $0x78] sm:$0xff]
    %v59 = vld [vmem:[#allocation5] sm:$0xff]
    %v60 = vld [vmem:[#allocation5 + $0x8] sm:$0xff]
    %v61 = vld [vmem:[#allocation5 + $0x10] sm:$0xff]
    %v62 = vld [vmem:[#allocation5 + $0x18] sm:$0xff]
    %v63 = vld [vmem:[%s2] sm:$0x1]
    %v65 = vlaneseq
    %v66 = vshrl.u32 %v65, 7
    %v67 = vsub.s32 0, %v66
    %v68 = vrot.slane %v63, %v67
    %vm70 = vcmask 261120
    %v72 = vsel %vm70, %v43, 0
    %v75 = vsel %vm70, %v44, 0
    %v78 = vsel %vm70, %v45, 0
    %v81 = vsel %vm70, %v46, 0
    %v84 = vsel %vm70, %v47, 0
    %v87 = vsel %vm70, %v48, 0
    %v90 = vsel %vm70, %v49, 0
    %v93 = vsel %vm70, %v50, 0
    %v96 = vsel %vm70, %v51, 0
    %v99 = vsel %vm70, %v52, 0
    %v102 = vsel %vm70, %v53, 0
    %v105 = vsel %vm70, %v54, 0
    %v108 = vsel %vm70, %v55, 0
    %v111 = vsel %vm70, %v56, 0
    %v114 = vsel %vm70, %v57, 0
    %v117 = vsel %vm70, %v58, 0
    %119 = vmatprep.subr.mxu0 0.0
    %120 = vmatpush1.msra.mxu0 %v59
    %121 = vmatprep.subr.mxu0 0.0
    %122 = vmatpush1.msra.mxu0 %v60
    %123 = vmatprep.subr.mxu0 0.0
    %124 = vmatpush1.msra.mxu0 %v61
    %125 = vmatprep.subr.mxu0 0.0
    %126 = vmatpush1.msra.mxu0 %v62
    %127 = vmatprep.subr.mxu0 0.0
    %128 = vmatpush1.msra.mxu0 0.0
    %129 = vmatprep.subr.mxu0 0.0
    %130 = vmatpush1.msra.mxu0 0.0
    %131 = vmatprep.subr.mxu0 0.0
    %132 = vmatpush1.msra.mxu0 0.0
    %133 = vmatprep.subr.mxu0 0.0
    %134 = vmatpush1.msra.mxu0 0.0
    %135 = vmatprep.subr.mxu0 0.0
    %136 = vmatpush1.msra.mxu0 0.0
    %137 = vmatprep.subr.mxu0 0.0
    %138 = vmatpush1.msra.mxu0 0.0
    %139 = vmatprep.subr.mxu0 0.0
    %140 = vmatpush1.msra.mxu0 0.0
    %141 = vmatprep.subr.mxu0 0.0
    %142 = vmatpush1.msra.mxu0 0.0
    %143 = vmatprep.subr.mxu0 0.0
    %144 = vmatpush1.msra.mxu0 0.0
    %145 = vmatprep.subr.mxu0 0.0
    %146 = vmatpush1.msra.mxu0 0.0
    %147 = vmatprep.subr.mxu0 0.0
    %148 = vmatpush1.msra.mxu0 0.0
    %149 = vmatprep.subr.mxu0 0.0
    %150 = vmatpush1.msra.mxu0 0.0
    %151 = vmatprep.subr.mxu0 0.0
    %152 = vmatpush1.msra.mxu0 0.0
    %153 = vmatprep.subr.mxu0 0.0
    %154 = vmatpush1.msra.mxu0 0.0
    %155 = vmatprep.subr.mxu0 0.0
    %156 = vmatpush1.msra.mxu0 0.0
    %157 = vmatprep.subr.mxu0 0.0
    %158 = vmatpush1.msra.mxu0 0.0
    %159 = vmatprep.subr.mxu0 0.0
    %160 = vmatpush1.msra.mxu0 0.0
    %161 = vmatprep.subr.mxu0 0.0
    %162 = vmatpush1.msra.mxu0 0.0
    %163 = vmatprep.subr.mxu0 0.0
    %164 = vmatpush1.msra.mxu0 0.0
    %165 = vmatprep.subr.mxu0 0.0
    %166 = vmatpush1.msra.mxu0 0.0
    %167 = vmatprep.subr.mxu0 0.0
    %168 = vmatpush1.msra.mxu0 0.0
    %169 = vmatprep.subr.mxu0 0.0
    %170 = vmatpush1.msra.mxu0 0.0
    %171 = vmatprep.subr.mxu0 0.0
    %172 = vmatpush1.msra.mxu0 0.0
    %173 = vmatprep.subr.mxu0 0.0
    %174 = vmatpush1.msra.mxu0 0.0
    %175 = vmatprep.subr.mxu0 0.0
    %176 = vmatpush1.msra.mxu0 0.0
    %177 = vmatprep.subr.mxu0 0.0
    %178 = vmatpush1.msra.mxu0 0.0
    %179 = vmatprep.subr.mxu0 0.0
    %180 = vmatpush1.msra.mxu0 0.0
    %181 = vmatprep.subr.mxu0 0.0
    %182 = vmatpush1.msra.mxu0 0.0
    %183 = vmatprep.mubr.f32.mxu0 0.0
    %184 = vmatmul.mubr.f32.gmra.mrb[0].mxu0 %v72
    %v185 = vpop.f32.mrb[0].mxu0
    %v186 = vadd.f32 %v68, %v185
    %v187 = vpop.f32.mrb[0].mxu0
    %188 = vmatprep.mubr.f32.mxu0 0.0
    %189 = vmatmul.mubr.f32.gmra.mrb[0].mxu0 %v75
    %v190 = vpop.f32.mrb[0].mxu0
    %v191 = vadd.f32 %v68, %v190
    %v192 = vpop.f32.mrb[0].mxu0
    %193 = vmatprep.mubr.f32.mxu0 0.0
    %194 = vmatmul.mubr.f32.gmra.mrb[0].mxu0 %v78
    %v195 = vpop.f32.mrb[0].mxu0
    %v196 = vadd.f32 %v68, %v195
    %v197 = vpop.f32.mrb[0].mxu0
    %198 = vmatprep.mubr.f32.mxu0 0.0
    %199 = vmatmul.mubr.f32.gmra.mrb[0].mxu0 %v81
    %v200 = vpop.f32.mrb[0].mxu0
    %v201 = vadd.f32 %v68, %v200
    %v202 = vpop.f32.mrb[0].mxu0
    %203 = vmatprep.mubr.f32.mxu0 0.0
    %204 = vmatmul.mubr.f32.gmra.mrb[0].mxu0 %v84
    %v205 = vpop.f32.mrb[0].mxu0
    %v206 = vadd.f32 %v68, %v205
    %v207 = vpop.f32.mrb[0].mxu0
    %208 = vmatprep.mubr.f32.mxu0 0.0
    %209 = vmatmul.mubr.f32.gmra.mrb[0].mxu0 %v87
    %v210 = vpop.f32.mrb[0].mxu0
    %v211 = vadd.f32 %v68, %v210
    %v212 = vpop.f32.mrb[0].mxu0
    %213 = vmatprep.mubr.f32.mxu0 0.0
    %214 = vmatmul.mubr.f32.gmra.mrb[0].mxu0 %v90
    %v215 = vpop.f32.mrb[0].mxu0
    %v216 = vadd.f32 %v68, %v215
    %v217 = vpop.f32.mrb[0].mxu0
    %218 = vmatprep.mubr.f32.mxu0 0.0
    %219 = vmatmul.mubr.f32.gmra.mrb[0].mxu0 %v93
    %v220 = vpop.f32.mrb[0].mxu0
    %v221 = vadd.f32 %v68, %v220
    %v222 = vpop.f32.mrb[0].mxu0
    %223 = vmatprep.mubr.f32.mxu0 0.0
    %224 = vmatmul.mubr.f32.gmra.mrb[0].mxu0 %v96
    %v225 = vpop.f32.mrb[0].mxu0
    %v226 = vadd.f32 %v68, %v225
    %v227 = vpop.f32.mrb[0].mxu0
    %228 = vmatprep.mubr.f32.mxu0 0.0
    %229 = vmatmul.mubr.f32.gmra.mrb[0].mxu0 %v99
    %v230 = vpop.f32.mrb[0].mxu0
    %v231 = vadd.f32 %v68, %v230
    %v232 = vpop.f32.mrb[0].mxu0
    %233 = vmatprep.mubr.f32.mxu0 0.0
    %234 = vmatmul.mubr.f32.gmra.mrb[0].mxu0 %v102
    %v235 = vpop.f32.mrb[0].mxu0
    %v236 = vadd.f32 %v68, %v235
    %v237 = vpop.f32.mrb[0].mxu0
    %238 = vmatprep.mubr.f32.mxu0 0.0
    %239 = vmatmul.mubr.f32.gmra.mrb[0].mxu0 %v105
    %v240 = vpop.f32.mrb[0].mxu0
    %v241 = vadd.f32 %v68, %v240
    %v242 = vpop.f32.mrb[0].mxu0
    %243 = vmatprep.mubr.f32.mxu0 0.0
    %244 = vmatmul.mubr.f32.gmra.mrb[0].mxu0 %v108
    %v245 = vpop.f32.mrb[0].mxu0
    %v246 = vadd.f32 %v68, %v245
    %v247 = vpop.f32.mrb[0].mxu0
    %248 = vmatprep.mubr.f32.mxu0 0.0
    %249 = vmatmul.mubr.f32.gmra.mrb[0].mxu0 %v111
    %v250 = vpop.f32.mrb[0].mxu0
    %v251 = vadd.f32 %v68, %v250
    %v252 = vpop.f32.mrb[0].mxu0
    %253 = vmatprep.mubr.f32.mxu0 0.0
    %254 = vmatmul.mubr.f32.gmra.mrb[0].mxu0 %v114
    %v255 = vpop.f32.mrb[0].mxu0
    %v256 = vadd.f32 %v68, %v255
    %v257 = vpop.f32.mrb[0].mxu0
    %258 = vmatprep.mubr.f32.mxu0 0.0
    %259 = vmatmul.mubr.f32.gmra.mrb[0].mxu0 %v117
    %v260 = vpop.f32.mrb[0].mxu0
    %v261 = vadd.f32 %v68, %v260
    %v262 = vpop.f32.mrb[0].mxu0
    %263 = vdwg.mxu0
    %264 = vst [vmem:[#allocation7] sm:$0xff] %v186
    %265 = vst [vmem:[#allocation7 + $0x8] sm:$0xff] %v191
    %266 = vst [vmem:[#allocation7 + $0x10] sm:$0xff] %v196
    %267 = vst [vmem:[#allocation7 + $0x18] sm:$0xff] %v201
    %268 = vst [vmem:[#allocation7 + $0x20] sm:$0xff] %v206
    %269 = vst [vmem:[#allocation7 + $0x28] sm:$0xff] %v211
    %270 = vst [vmem:[#allocation7 + $0x30] sm:$0xff] %v216
    %271 = vst [vmem:[#allocation7 + $0x38] sm:$0xff] %v221
    %272 = vst [vmem:[#allocation7 + $0x40] sm:$0xff] %v226
    %273 = vst [vmem:[#allocation7 + $0x48] sm:$0xff] %v231
    %274 = vst [vmem:[#allocation7 + $0x50] sm:$0xff] %v236
    %275 = vst [vmem:[#allocation7 + $0x58] sm:$0xff] %v241
    %276 = vst [vmem:[#allocation7 + $0x60] sm:$0xff] %v246
    %277 = vst [vmem:[#allocation7 + $0x68] sm:$0xff] %v251
    %278 = vst [vmem:[#allocation7 + $0x70] sm:$0xff] %v256
    %279 = vst [vmem:[#allocation7 + $0x78] sm:$0xff] %v261
    // Predicated region
    $region22: #{tpu_custom_call.1} parent=1 // pred_check
      _
    $region23: #{tpu_custom_call.1} parent=1 // pred_check_branch
      %281 = sbr.rel (0) target = $region25
    $region24: #{tpu_custom_call.1} parent=1 // pred_region
      %s283 = ssub.s32 2048, 256
      %284 = vsyncadd [#allocation4], %s283
      %s285 = sshll.u32 [#allocation7], 4
      %s286 = int_to_ptr.vmem [resolvable:$true] %s285
      %291 = dma.vmem_to_hbm [thread:$0]  %s286, 256, %s3, [#allocation4], 128, 128, 8
    $region25: #{tpu_custom_call.1} parent=1 // pred_fallthru
      _
    // Predicated region
    $region26: #{tpu_custom_call.1} parent=1 // pred_check
      _
    $region27: #{tpu_custom_call.1} parent=1 // pred_check_branch
      %293 = sbr.rel (0) target = $region29
    $region28: #{tpu_custom_call.1} parent=1 // pred_region
      %294 = dma.done [#allocation4], 2048
    $region29: #{tpu_custom_call.1} parent=1 // pred_fallthru
      _
    %295 = vsyncpa [#allocation3], 1
    %296 = vsyncpa [#allocation6], 1
    %297 = vsyncpa [#allocation4], 1

// kernel: tpu_custom_call.1
$region0: #{tpu_custom_call.1}
  #allocation0 [shape = 'u32[]', space=smem, size = 0x4, offset = 0x4, fixed_abs, tag = 'smem constant byte address 0x4 - core index']
  #allocation1 [shape = 'u32[144,128]{1,0:T(1,128)}', space=vmem, size = 0x12000, scoped, tag = 'internal scratch']
  %s0 = inlined_call_operand.hbm [shape: f32[16,32], index: 0, kind: input, shape index: {}]
  %s1 = inlined_call_operand.hbm [shape: f32[32,128], index: 1, kind: input, shape index: {}]
  %s2 = inlined_call_operand.vmem [shape: f32[1,128], index: 2, kind: input, shape index: {}]
  %s3 = inlined_call_operand.hbm [shape: f32[16,128], index: 3, kind: output, shape index: {}]
  %s4 = sld [smem:[#allocation0]]
  $region30: #{tpu_custom_call.1} parent=0
    _
  %s6 = ssub.s32 1, %s4
  %s7 = scalar_select 0, %s6, %s4
  $region1: #{tpu_custom_call.1} parent=0
    #allocation2 [shape = 'u8[65536]{0}', space=vmem, size = 0x10000, scoped, tag = 'input window, operand 0, single buffered']
    #allocation3 [shape = 's32[1]{0}', space=sflag, size = 0x4, scoped, tag = 'scoped memory for tpu_custom_call.1']
    #allocation4 [shape = 's32[1]{0}', space=sflag, size = 0x4, scoped, tag = 'scoped memory for tpu_custom_call.1']
    #allocation5 [shape = 'u8[16384]{0}', space=vmem, size = 0x4000, scoped, tag = 'input window, operand 1, single buffered']
    #allocation6 [shape = 's32[1]{0}', space=sflag, size = 0x4, scoped, tag = 'scoped memory for tpu_custom_call.1']
    #allocation7 [shape = 'u8[65536]{0}', space=vmem, size = 0x10000, scoped, tag = 'output window, operand 0, single buffered']
    %8 = vsyncpa [#allocation3], 0
    %9 = vsyncpa [#allocation6], 0
    %10 = vsyncpa [#allocation4], 0
    // Predicated region
    $region2: #{tpu_custom_call.1} parent=1 // pred_check
      _
    $region3: #{tpu_custom_call.1} parent=1 // pred_check_branch
      %12 = sbr.rel (0) target = $region5
    $region4: #{tpu_custom_call.1} parent=1 // pred_region
      %s14 = ssub.s32 2048, 256
      %15 = vsyncadd [#allocation3], %s14
      %s16 = sshll.u32 [#allocation2], 4
      %s17 = int_to_ptr.vmem [resolvable:$true] %s16
      %22 = dma.hbm_to_vmem [thread:$0]  %s0, 256, %s17, [#allocation3], 128, 128, 8
    $region5: #{tpu_custom_call.1} parent=1 // pred_fallthru
      _
    // Predicated region
    $region6: #{tpu_custom_call.1} parent=1 // pred_check
      _
    $region7: #{tpu_custom_call.1} parent=1 // pred_check_branch
      %24 = sbr.rel (0) target = $region9
    $region8: #{tpu_custom_call.1} parent=1 // pred_region
      %s26 = ssub.s32 512, 512
      %27 = vsyncadd [#allocation6], %s26
      %s28 = sshll.u32 [#allocation5], 4
      %s29 = int_to_ptr.vmem [resolvable:$true] %s28
      %34 = dma.hbm_to_vmem [thread:$0]  %s1, 512, %s29, [#allocation6], 128, 128, 8
    $region9: #{tpu_custom_call.1} parent=1 // pred_fallthru
      _
    // Predicated region
    $region10: #{tpu_custom_call.1} parent=1 // pred_check
      _
    $region11: #{tpu_custom_call.1} parent=1 // pred_check_branch
      %36 = sbr.rel (0) target = $region13
    $region12: #{tpu_custom_call.1} parent=1 // pred_region
      _
    $region13: #{tpu_custom_call.1} parent=1 // pred_fallthru
      _
    // Predicated region
    $region14: #{tpu_custom_call.1} parent=1 // pred_check
      _
    $region15: #{tpu_custom_call.1} parent=1 // pred_check_branch
      %38 = sbr.rel (0) target = $region17
    $region16: #{tpu_custom_call.1} parent=1 // pred_region
      %39 = dma.done [#allocation3], 2048
    $region17: #{tpu_custom_call.1} parent=1 // pred_fallthru
      _
    // Predicated region
    $region18: #{tpu_custom_call.1} parent=1 // pred_check
      _
    $region19: #{tpu_custom_call.1} parent=1 // pred_check_branch
      %41 = sbr.rel (0) target = $region21
    $region20: #{tpu_custom_call.1} parent=1 // pred_region
      %42 = dma.done [#allocation6], 512
    $region21: #{tpu_custom_call.1} parent=1 // pred_fallthru
      _
    %v43 = vld [vmem:[#allocation2] sm:$0xff]
    %v44 = vld [vmem:[#allocation2 + $0x8] sm:$0xff]
    %v45 = vld [vmem:[#allocation2 + $0x10] sm:$0xff]
    %v46 = vld [vmem:[#allocation2 + $0x18] sm:$0xff]
    %v47 = vld [vmem:[#allocation2 + $0x20] sm:$0xff]
    %v48 = vld [vmem:[#allocation2 + $0x28] sm:$0xff]
    %v49 = vld [vmem:[#allocation2 + $0x30] sm:$0xff]
    %v50 = vld [vmem:[#allocation2 + $0x38] sm:$0xff]
    %v51 = vld [vmem:[#allocation2 + $0x40] sm:$0xff]
    %v52 = vld [vmem:[#allocation2 + $0x48] sm:$0xff]
    %v53 = vld [vmem:[#allocation2 + $0x50] sm:$0xff]
    %v54 = vld [vmem:[#allocation2 + $0x58] sm:$0xff]
    %v55 = vld [vmem:[#allocation2 + $0x60] sm:$0xff]
    %v56 = vld [vmem:[#allocation2 + $0x68] sm:$0xff]
    %v57 = vld [vmem:[#allocation2 + $0x70] sm:$0xff]
    %v58 = vld [vmem:[#allocation2 + $0x78] sm:$0xff]
    %v59 = vld [vmem:[#allocation5] sm:$0xff]
    %v60 = vld [vmem:[#allocation5 + $0x8] sm:$0xff]
    %v61 = vld [vmem:[#allocation5 + $0x10] sm:$0xff]
    %v62 = vld [vmem:[#allocation5 + $0x18] sm:$0xff]
    %v63 = vld [vmem:[%s2] sm:$0x1]
    %v65 = vlaneseq
    %v66 = vshrl.u32 %v65, 7
    %v67 = vsub.s32 0, %v66
    %v68 = vrot.slane %v63, %v67
    %vm70 = vcmask 261120
    %v72 = vsel %vm70, %v43, 0
    %v75 = vsel %vm70, %v44, 0
    %v78 = vsel %vm70, %v45, 0
    %v81 = vsel %vm70, %v46, 0
    %v84 = vsel %vm70, %v47, 0
    %v87 = vsel %vm70, %v48, 0
    %v90 = vsel %vm70, %v49, 0
    %v93 = vsel %vm70, %v50, 0
    %v96 = vsel %vm70, %v51, 0
    %v99 = vsel %vm70, %v52, 0
    %v102 = vsel %vm70, %v53, 0
    %v105 = vsel %vm70, %v54, 0
    %v108 = vsel %vm70, %v55, 0
    %v111 = vsel %vm70, %v56, 0
    %v114 = vsel %vm70, %v57, 0
    %v117 = vsel %vm70, %v58, 0
    %119 = vmatprep.subr.mxu0 0.0
    %120 = vmatpush1.msra.mxu0 %v59
    %121 = vmatprep.subr.mxu0 0.0
    %122 = vmatpush1.msra.mxu0 %v60
    %123 = vmatprep.subr.mxu0 0.0
    %124 = vmatpush1.msra.mxu0 %v61
    %125 = vmatprep.subr.mxu0 0.0
    %126 = vmatpush1.msra.mxu0 %v62
    %127 = vmatprep.subr.mxu0 0.0
    %128 = vmatpush1.msra.mxu0 0.0
    %129 = vmatprep.subr.mxu0 0.0
    %130 = vmatpush1.msra.mxu0 0.0
    %131 = vmatprep.subr.mxu0 0.0
    %132 = vmatpush1.msra.mxu0 0.0
    %133 = vmatprep.subr.mxu0 0.0
    %134 = vmatpush1.msra.mxu0 0.0
    %135 = vmatprep.subr.mxu0 0.0
    %136 = vmatpush1.msra.mxu0 0.0
    %137 = vmatprep.subr.mxu0 0.0
    %138 = vmatpush1.msra.mxu0 0.0
    %139 = vmatprep.subr.mxu0 0.0
    %140 = vmatpush1.msra.mxu0 0.0
    %141 = vmatprep.subr.mxu0 0.0
    %142 = vmatpush1.msra.mxu0 0.0
    %143 = vmatprep.subr.mxu0 0.0
    %144 = vmatpush1.msra.mxu0 0.0
    %145 = vmatprep.subr.mxu0 0.0
    %146 = vmatpush1.msra.mxu0 0.0
    %147 = vmatprep.subr.mxu0 0.0
    %148 = vmatpush1.msra.mxu0 0.0
    %149 = vmatprep.subr.mxu0 0.0
    %150 = vmatpush1.msra.mxu0 0.0
    %151 = vmatprep.subr.mxu0 0.0
    %152 = vmatpush1.msra.mxu0 0.0
    %153 = vmatprep.subr.mxu0 0.0
    %154 = vmatpush1.msra.mxu0 0.0
    %155 = vmatprep.subr.mxu0 0.0
    %156 = vmatpush1.msra.mxu0 0.0
    %157 = vmatprep.subr.mxu0 0.0
    %158 = vmatpush1.msra.mxu0 0.0
    %159 = vmatprep.subr.mxu0 0.0
    %160 = vmatpush1.msra.mxu0 0.0
    %161 = vmatprep.subr.mxu0 0.0
    %162 = vmatpush1.msra.mxu0 0.0
    %163 = vmatprep.subr.mxu0 0.0
    %164 = vmatpush1.msra.mxu0 0.0
    %165 = vmatprep.subr.mxu0 0.0
    %166 = vmatpush1.msra.mxu0 0.0
    %167 = vmatprep.subr.mxu0 0.0
    %168 = vmatpush1.msra.mxu0 0.0
    %169 = vmatprep.subr.mxu0 0.0
    %170 = vmatpush1.msra.mxu0 0.0
    %171 = vmatprep.subr.mxu0 0.0
    %172 = vmatpush1.msra.mxu0 0.0
    %173 = vmatprep.subr.mxu0 0.0
    %174 = vmatpush1.msra.mxu0 0.0
    %175 = vmatprep.subr.mxu0 0.0
    %176 = vmatpush1.msra.mxu0 0.0
    %177 = vmatprep.subr.mxu0 0.0
    %178 = vmatpush1.msra.mxu0 0.0
    %179 = vmatprep.subr.mxu0 0.0
    %180 = vmatpush1.msra.mxu0 0.0
    %181 = vmatprep.subr.mxu0 0.0
    %182 = vmatpush1.msra.mxu0 0.0
    %183 = vmatprep.mubr.f32.mxu0 0.0
    %184 = vmatmul.mubr.f32.gmra.mrb[0].mxu0 %v72
    %v185 = vpop.f32.mrb[0].mxu0
    %v186 = vadd.f32 %v68, %v185
    %v187 = vpop.f32.mrb[0].mxu0
    %188 = vmatprep.mubr.f32.mxu0 0.0
    %189 = vmatmul.mubr.f32.gmra.mrb[0].mxu0 %v75
    %v190 = vpop.f32.mrb[0].mxu0
    %v191 = vadd.f32 %v68, %v190
    %v192 = vpop.f32.mrb[0].mxu0
    %193 = vmatprep.mubr.f32.mxu0 0.0
    %194 = vmatmul.mubr.f32.gmra.mrb[0].mxu0 %v78
    %v195 = vpop.f32.mrb[0].mxu0
    %v196 = vadd.f32 %v68, %v195
    %v197 = vpop.f32.mrb[0].mxu0
    %198 = vmatprep.mubr.f32.mxu0 0.0
    %199 = vmatmul.mubr.f32.gmra.mrb[0].mxu0 %v81
    %v200 = vpop.f32.mrb[0].mxu0
    %v201 = vadd.f32 %v68, %v200
    %v202 = vpop.f32.mrb[0].mxu0
    %203 = vmatprep.mubr.f32.mxu0 0.0
    %204 = vmatmul.mubr.f32.gmra.mrb[0].mxu0 %v84
    %v205 = vpop.f32.mrb[0].mxu0
    %v206 = vadd.f32 %v68, %v205
    %v207 = vpop.f32.mrb[0].mxu0
    %208 = vmatprep.mubr.f32.mxu0 0.0
    %209 = vmatmul.mubr.f32.gmra.mrb[0].mxu0 %v87
    %v210 = vpop.f32.mrb[0].mxu0
    %v211 = vadd.f32 %v68, %v210
    %v212 = vpop.f32.mrb[0].mxu0
    %213 = vmatprep.mubr.f32.mxu0 0.0
    %214 = vmatmul.mubr.f32.gmra.mrb[0].mxu0 %v90
    %v215 = vpop.f32.mrb[0].mxu0
    %v216 = vadd.f32 %v68, %v215
    %v217 = vpop.f32.mrb[0].mxu0
    %218 = vmatprep.mubr.f32.mxu0 0.0
    %219 = vmatmul.mubr.f32.gmra.mrb[0].mxu0 %v93
    %v220 = vpop.f32.mrb[0].mxu0
    %v221 = vadd.f32 %v68, %v220
    %v222 = vpop.f32.mrb[0].mxu0
    %223 = vmatprep.mubr.f32.mxu0 0.0
    %224 = vmatmul.mubr.f32.gmra.mrb[0].mxu0 %v96
    %v225 = vpop.f32.mrb[0].mxu0
    %v226 = vadd.f32 %v68, %v225
    %v227 = vpop.f32.mrb[0].mxu0
    %228 = vmatprep.mubr.f32.mxu0 0.0
    %229 = vmatmul.mubr.f32.gmra.mrb[0].mxu0 %v99
    %v230 = vpop.f32.mrb[0].mxu0
    %v231 = vadd.f32 %v68, %v230
    %v232 = vpop.f32.mrb[0].mxu0
    %233 = vmatprep.mubr.f32.mxu0 0.0
    %234 = vmatmul.mubr.f32.gmra.mrb[0].mxu0 %v102
    %v235 = vpop.f32.mrb[0].mxu0
    %v236 = vadd.f32 %v68, %v235
    %v237 = vpop.f32.mrb[0].mxu0
    %238 = vmatprep.mubr.f32.mxu0 0.0
    %239 = vmatmul.mubr.f32.gmra.mrb[0].mxu0 %v105
    %v240 = vpop.f32.mrb[0].mxu0
    %v241 = vadd.f32 %v68, %v240
    %v242 = vpop.f32.mrb[0].mxu0
    %243 = vmatprep.mubr.f32.mxu0 0.0
    %244 = vmatmul.mubr.f32.gmra.mrb[0].mxu0 %v108
    %v245 = vpop.f32.mrb[0].mxu0
    %v246 = vadd.f32 %v68, %v245
    %v247 = vpop.f32.mrb[0].mxu0
    %248 = vmatprep.mubr.f32.mxu0 0.0
    %249 = vmatmul.mubr.f32.gmra.mrb[0].mxu0 %v111
    %v250 = vpop.f32.mrb[0].mxu0
    %v251 = vadd.f32 %v68, %v250
    %v252 = vpop.f32.mrb[0].mxu0
    %253 = vmatprep.mubr.f32.mxu0 0.0
    %254 = vmatmul.mubr.f32.gmra.mrb[0].mxu0 %v114
    %v255 = vpop.f32.mrb[0].mxu0
    %v256 = vadd.f32 %v68, %v255
    %v257 = vpop.f32.mrb[0].mxu0
    %258 = vmatprep.mubr.f32.mxu0 0.0
    %259 = vmatmul.mubr.f32.gmra.mrb[0].mxu0 %v117
    %v260 = vpop.f32.mrb[0].mxu0
    %v261 = vadd.f32 %v68, %v260
    %v262 = vpop.f32.mrb[0].mxu0
    %263 = vdwg.mxu0
    %264 = vst [vmem:[#allocation7] sm:$0xff] %v186
    %265 = vst [vmem:[#allocation7 + $0x8] sm:$0xff] %v191
    %266 = vst [vmem:[#allocation7 + $0x10] sm:$0xff] %v196
    %267 = vst [vmem:[#allocation7 + $0x18] sm:$0xff] %v201
    %268 = vst [vmem:[#allocation7 + $0x20] sm:$0xff] %v206
    %269 = vst [vmem:[#allocation7 + $0x28] sm:$0xff] %v211
    %270 = vst [vmem:[#allocation7 + $0x30] sm:$0xff] %v216
    %271 = vst [vmem:[#allocation7 + $0x38] sm:$0xff] %v221
    %272 = vst [vmem:[#allocation7 + $0x40] sm:$0xff] %v226
    %273 = vst [vmem:[#allocation7 + $0x48] sm:$0xff] %v231
    %274 = vst [vmem:[#allocation7 + $0x50] sm:$0xff] %v236
    %275 = vst [vmem:[#allocation7 + $0x58] sm:$0xff] %v241
    %276 = vst [vmem:[#allocation7 + $0x60] sm:$0xff] %v246
    %277 = vst [vmem:[#allocation7 + $0x68] sm:$0xff] %v251
    %278 = vst [vmem:[#allocation7 + $0x70] sm:$0xff] %v256
    %279 = vst [vmem:[#allocation7 + $0x78] sm:$0xff] %v261
    // Predicated region
    $region22: #{tpu_custom_call.1} parent=1 // pred_check
      _
    $region23: #{tpu_custom_call.1} parent=1 // pred_check_branch
      %281 = sbr.rel (0) target = $region25
    $region24: #{tpu_custom_call.1} parent=1 // pred_region
      %s283 = ssub.s32 2048, 256
      %284 = vsyncadd [#allocation4], %s283
      %s285 = sshll.u32 [#allocation7], 4
      %s286 = int_to_ptr.vmem [resolvable:$true] %s285
      %291 = dma.vmem_to_hbm [thread:$0]  %s286, 256, %s3, [#allocation4], 128, 128, 8
    $region25: #{tpu_custom_call.1} parent=1 // pred_fallthru
      _
    // Predicated region
    $region26: #{tpu_custom_call.1} parent=1 // pred_check
      _
    $region27: #{tpu_custom_call.1} parent=1 // pred_check_branch
      %293 = sbr.rel (0) target = $region29
    $region28: #{tpu_custom_call.1} parent=1 // pred_region
      %294 = dma.done [#allocation4], 2048
    $region29: #{tpu_custom_call.1} parent=1 // pred_fallthru
      _
    %295 = vsyncpa [#allocation3], 1
    %296 = vsyncpa [#allocation6], 1
    %297 = vsyncpa [#allocation4], 1

</llo_original>
